<compile_context>
chip_gen: v5e
topology: v5e:2x2
jax: 0.10.0
libtpu: 0.0.40
codegen_flags: <defaults>
</compile_context>

<pallas_src>
import functools

import jax
import jax.numpy as jnp
from jax import lax
from jax.experimental import pallas as pl
from jax.experimental.pallas import tpu as pltpu


def _block_kernel(x_ref, w_ref, b_ref, o_ref, acc_ref):
    """One (tm, tn) output tile; accumulates over the K grid axis."""
    k = pl.program_id(2)

    @pl.when(k == 0)
    def _():
        acc_ref[...] = jnp.zeros_like(acc_ref)

    # x tile: (tm, tk), w tile: (tn, tk)  -> contract both on their last dim.
    # This is ReLU-free pure MXU work in the inner loop (NT matmul, no XLU
    # transpose, f32 accumulation on the MXU result path).
    acc_ref[...] += lax.dot_general(
        x_ref[...], w_ref[...],
        dimension_numbers=(((1,), (1,)), ((), ())),
        preferred_element_type=jnp.float32)

    # Epilogue only once, on the final K step: bias add + ReLU + store.
    @pl.when(k == pl.num_programs(2) - 1)
    def _():
        out = acc_ref[...] + b_ref[...]          # (1, tn) broadcasts over rows
        o_ref[...] = jnp.maximum(out, 0.0).astype(o_ref.dtype)


def _round_up(x, m):
    return ((x + m - 1) // m) * m


@functools.partial(jax.jit, static_argnames=("tm", "tn", "tk"))
def block_forward(x, weight, bias, *, tm=None, tn=None, tk=None):
    """Equivalent of Block.forward: ReLU(x @ weight.T + bias).

    x:      (B, in_size)          float32
    weight: (out_size, in_size)   (PyTorch nn.Linear layout, NOT transposed)
    bias:   (out_size,)
    """
    B, in_size = x.shape
    out_size = weight.shape[0]

    # Tile sizes: lane-dense (multiples of 128 on N/K), sublane-aligned on M,
    # capped so double-buffered f32 tiles fit comfortably in v7x / v5e VMEM.
    tm = tm if tm is not None else min(256, _round_up(B, 8))
    tn = tn if tn is not None else min(256, _round_up(out_size, 128))
    tk = tk if tk is not None else min(512, _round_up(in_size, 128))

    # Pad the problem up to the tile grid (zeros are exact no-ops for the
    # matmul; padded output rows/cols are sliced off below).
    Bp = _round_up(B, tm)
    Kp = _round_up(in_size, tk)
    Np = _round_up(out_size, tn)

    xp = x if (Bp == B and Kp == in_size) else jnp.pad(
        x, ((0, Bp - B), (0, Kp - in_size)))
    wp = weight if (Np == out_size and Kp == in_size) else jnp.pad(
        weight, ((0, Np - out_size), (0, Kp - in_size)))
    bp = bias if Np == out_size else jnp.pad(bias, (0, Np - out_size))
    b2d = bp.reshape(1, Np)

    # TODO(synk): on v6e/v7x, casting xp/wp to bf16 here (keeping the f32
    # accumulator) roughly 4x's MXU throughput at a small accuracy cost.

    grid = (Bp // tm, Np // tn, Kp // tk)

    out_padded = pl.pallas_call(
        _block_kernel,
        out_shape=jax.ShapeDtypeStruct((Bp, Np), x.dtype),
        grid_spec=pltpu.PrefetchScalarGridSpec(
            num_scalar_prefetch=0,
            grid=grid,
            in_specs=[
                pl.BlockSpec((tm, tk), lambda i, j, k: (i, k)),   # x
                pl.BlockSpec((tn, tk), lambda i, j, k: (j, k)),   # weight (out,in)
                pl.BlockSpec((1, tn), lambda i, j, k: (0, j)),    # bias
            ],
            out_specs=pl.BlockSpec((tm, tn), lambda i, j, k: (i, j)),
            scratch_shapes=[pltpu.VMEM((tm, tn), jnp.float32)],
        ),
        compiler_params=pltpu.CompilerParams(
            dimension_semantics=("parallel", "parallel", "arbitrary")),
    )(xp, wp, b2d)

    return out_padded[:B, :out_size]


def block_reference(x, weight, bias):
    return jnp.maximum(x @ weight.T + bias, 0.0)


def _run_case(key, batch, in_size, out_size):
    kx, kw, kb = jax.random.split(key, 3)
    x = jax.random.normal(kx, (batch, in_size), dtype=jnp.float32)
    bound = 1.0 / (in_size ** 0.5)
    weight = jax.random.uniform(kw, (out_size, in_size), jnp.float32,
                                minval=-bound, maxval=bound)
    bias = jax.random.uniform(kb, (out_size,), jnp.float32,
                              minval=-bound, maxval=bound)

    out = jax.block_until_ready(block_forward(x, weight, bias))
    ref = block_reference(x, weight, bias)
    assert out.shape == (batch, out_size)
    assert jnp.allclose(out, ref, atol=1e-4, rtol=1e-5), \
        f"mismatch vs reference for shape ({batch},{in_size})->{out_size}"


if __name__ == "__main__":
    key = jax.random.PRNGKey(0)
    k1, k2 = jax.random.split(key)

    # Small shape consistent with nn.Linear(in_size, out_size).
    _run_case(k1, batch=8, in_size=32, out_size=32)

    # Slightly larger case that exercises the multi-step K accumulator,
    # lane-dense 256-wide output tiles, and the padding/slicing path.
    _run_case(k2, batch=16, in_size=640, out_size=160)

    print("KERNEL_OK")
</pallas_src>

<mosaic_0001>
module attributes {stable_mosaic.version = 11 : i64} {
  func.func @_block_kernel(%arg0: i32, %arg1: i32, %arg2: i32, %arg3: memref<8x128xf32, #tpu.memory_space<vmem>>, %arg4: memref<128x128xf32, #tpu.memory_space<vmem>>, %arg5: memref<1x128xf32, #tpu.memory_space<vmem>>, %arg6: memref<8x128xf32, #tpu.memory_space<vmem>>, %arg7: memref<8x128xf32, #tpu.memory_space<vmem>>) attributes {dimension_semantics = [#tpu.dimension_semantics<parallel>, #tpu.dimension_semantics<parallel>, #tpu.dimension_semantics<arbitrary>], iteration_bounds = array<i64: 1, 1, 1>, scalar_prefetch = 0 : i64, scratch_operands = 1 : i64, tpu.core_type = #tpu.core_type<tc>, window_params = [{transform_indices = @transform_0, window_bounds = array<i64: 8, 128>}, {transform_indices = @transform_1, window_bounds = array<i64: 128, 128>}, {transform_indices = @transform_2, window_bounds = array<i64: 1, 128>}, {transform_indices = @transform_3, window_bounds = array<i64: 8, 128>}]} {
    %c0_i32 = arith.constant 0 : i32
    %0 = arith.cmpi eq, %arg2, %c0_i32 : i32
    %1 = arith.extui %0 : i1 to i32
    %c0_i32_0 = arith.constant 0 : i32
    %2 = arith.cmpi ne, %1, %c0_i32_0 : i32
    scf.if %2 {
      %cst_10 = arith.constant 0.000000e+00 : f32
      %12 = vector.broadcast %cst_10 : f32 to vector<8x128xf32>
      %c0_11 = arith.constant 0 : index
      %c0_12 = arith.constant 0 : index
      %13 = vector.load %arg7[%c0_11, %c0_12] : memref<8x128xf32, #tpu.memory_space<vmem>>, vector<8x128xf32>
      tpu.vector_store %arg7[%c0_11, %c0_12], %12 {strides = array<i32>} : memref<8x128xf32, #tpu.memory_space<vmem>>, vector<8x128xf32>,
    } else {
    }
    %c0 = arith.constant 0 : index
    %c0_1 = arith.constant 0 : index
    %3 = vector.load %arg7[%c0, %c0_1] : memref<8x128xf32, #tpu.memory_space<vmem>>, vector<8x128xf32>
    %c0_2 = arith.constant 0 : index
    %c0_3 = arith.constant 0 : index
    %4 = vector.load %arg3[%c0_2, %c0_3] : memref<8x128xf32, #tpu.memory_space<vmem>>, vector<8x128xf32>
    %c0_4 = arith.constant 0 : index
    %c0_5 = arith.constant 0 : index
    %5 = vector.load %arg4[%c0_4, %c0_5] : memref<128x128xf32, #tpu.memory_space<vmem>>, vector<128x128xf32>
    %cst = arith.constant dense<0.000000e+00> : vector<8x128xf32>
    %6 = tpu.matmul %4, %5, %cst {dimension_numbers = #tpu.dot_dimension_numbers<[1], [1], [0], [0], [0, 0, 1, 0], [], []>} : vector<8x128xf32>, vector<128x128xf32>, vector<8x128xf32> -> vector<8x128xf32>
    %7 = arith.addf %3, %6 : vector<8x128xf32>
    %c0_6 = arith.constant 0 : index
    %c0_7 = arith.constant 0 : index
    %8 = vector.load %arg7[%c0_6, %c0_7] : memref<8x128xf32, #tpu.memory_space<vmem>>, vector<8x128xf32>
    tpu.vector_store %arg7[%c0_6, %c0_7], %7 {strides = array<i32>} : memref<8x128xf32, #tpu.memory_space<vmem>>, vector<8x128xf32>,
    %c0_i32_8 = arith.constant 0 : i32
    %9 = arith.cmpi eq, %arg2, %c0_i32_8 : i32
    %10 = arith.extui %9 : i1 to i32
    %c0_i32_9 = arith.constant 0 : i32
    %11 = arith.cmpi ne, %10, %c0_i32_9 : i32
    scf.if %11 {
      %c0_10 = arith.constant 0 : index
      %c0_11 = arith.constant 0 : index
      %12 = vector.load %arg7[%c0_10, %c0_11] : memref<8x128xf32, #tpu.memory_space<vmem>>, vector<8x128xf32>
      %c0_12 = arith.constant 0 : index
      %c0_13 = arith.constant 0 : index
      %13 = vector.load %arg5[%c0_12, %c0_13] : memref<1x128xf32, #tpu.memory_space<vmem>>, vector<1x128xf32>
      %14 = vector.broadcast %13 : vector<1x128xf32> to vector<8x128xf32>
      %15 = arith.addf %12, %14 : vector<8x128xf32>
      %cst_14 = arith.constant 0.000000e+00 : f32
      %16 = vector.broadcast %cst_14 : f32 to vector<8x128xf32>
      %17 = arith.maximumf %15, %16 : vector<8x128xf32>
      %c0_15 = arith.constant 0 : index
      %c0_16 = arith.constant 0 : index
      %18 = vector.load %arg6[%c0_15, %c0_16] : memref<8x128xf32, #tpu.memory_space<vmem>>, vector<8x128xf32>
      tpu.vector_store %arg6[%c0_15, %c0_16], %17 {strides = array<i32>} : memref<8x128xf32, #tpu.memory_space<vmem>>, vector<8x128xf32>,
    } else {
    }
    return
  }
  func.func @transform_0(%arg0: i32, %arg1: i32, %arg2: i32) -> (i32, i32) {
    %c0_i32 = arith.constant 0 : i32
    return %arg0, %arg2 : i32, i32
  }
  func.func @transform_1(%arg0: i32, %arg1: i32, %arg2: i32) -> (i32, i32) {
    %c0_i32 = arith.constant 0 : i32
    return %arg1, %arg2 : i32, i32
  }
  func.func @transform_2(%arg0: i32, %arg1: i32, %arg2: i32) -> (i32, i32) {
    %c0_i32 = arith.constant 0 : i32
    %c0_i32_0 = arith.constant 0 : i32
    return %c0_i32, %arg1 : i32, i32
  }
  func.func @transform_3(%arg0: i32, %arg1: i32, %arg2: i32) -> (i32, i32) {
    %c0_i32 = arith.constant 0 : i32
    return %arg0, %arg1 : i32, i32
  }
}

</mosaic_0001>

<llo_original>
// kernel: block_forward.1
$region0: #{block_forward.1}
  #allocation0 [shape = 'u32[]', space=smem, size = 0x4, offset = 0x4, fixed_abs, tag = 'smem constant byte address 0x4 - core index']
  #allocation1 [shape = 'u32[72,128]{1,0:T(1,128)}', space=vmem, size = 0x9000, scoped, tag = 'internal scratch']
  #allocation2 [shape = 'f32[8,128]{1,0:T(8,128)}', space=vmem, size = 0x1000, scoped, tag = 'scratch operand']
  %s0 = inlined_call_operand.vmem [shape: f32[8,128], index: 0, kind: input, shape index: {}]
  %s1 = inlined_call_operand.vmem [shape: f32[128,128], index: 1, kind: input, shape index: {}]
  %s2 = inlined_call_operand.vmem [shape: f32[1,128], index: 2, kind: input, shape index: {}]
  %s3 = inlined_call_operand.hbm [shape: f32[8,128], index: 3, kind: output, shape index: {}]
  %s4 = sld [smem:[#allocation0]]
  $region30: #{block_forward.1} parent=0
    _
  %s6 = ssub.s32 1, %s4
  %s7 = scalar_select 0, %s6, %s4
  $region1: #{block_forward.1} parent=0
    #allocation3 [shape = 'u8[4096]{0}', space=vmem, size = 0x1000, scoped, tag = 'output window, operand 0, single buffered']
    #allocation4 [shape = 's32[1]{0}', space=sflag, size = 0x4, scoped, tag = 'scoped memory for block_forward.1']
    %8 = vsyncpa [#allocation4], 0
    // Predicated region
    $region2: #{block_forward.1} parent=1 // pred_check
      _
    $region3: #{block_forward.1} parent=1 // pred_check_branch
      %10 = sbr.rel (0) target = $region5
    $region4: #{block_forward.1} parent=1 // pred_region
      _
    $region5: #{block_forward.1} parent=1 // pred_fallthru
      _
    // Predicated region
    $region6: #{block_forward.1} parent=1 // pred_check
      _
    $region7: #{block_forward.1} parent=1 // pred_check_branch
      %12 = sbr.rel (0) target = $region9
    $region8: #{block_forward.1} parent=1 // pred_region
      _
    $region9: #{block_forward.1} parent=1 // pred_fallthru
      _
    // Predicated region
    $region10: #{block_forward.1} parent=1 // pred_check
      _
    $region11: #{block_forward.1} parent=1 // pred_check_branch
      %14 = sbr.rel (0) target = $region13
    $region12: #{block_forward.1} parent=1 // pred_region
      _
    $region13: #{block_forward.1} parent=1 // pred_fallthru
      _
    %p15 = scmp.eq.s32.totalorder 0, 0
    // Predicated region
    $region14: #{block_forward.1} parent=1 // pred_check
      %p16 = pneg %p15
    $region15: #{block_forward.1} parent=1 // pred_check_branch
      %18 = sbr.rel (%p16) target = $region17
    $region16: #{block_forward.1} parent=1 // pred_region
      %19 = vst [vmem:[#allocation2] sm:$0xff] 0.0
    $region17: #{block_forward.1} parent=1 // pred_fallthru
      _
    %v20 = vld [vmem:[#allocation2] sm:$0xff]
    %v21 = vld [vmem:[%s0] sm:$0xff]
    %v22 = vld [vmem:[%s1] sm:$0xff]
    %v23 = vld [vmem:[%s1 + $0x8] sm:$0xff]
    %v24 = vld [vmem:[%s1 + $0x10] sm:$0xff]
    %v25 = vld [vmem:[%s1 + $0x18] sm:$0xff]
    %v26 = vld [vmem:[%s1 + $0x20] sm:$0xff]
    %v27 = vld [vmem:[%s1 + $0x28] sm:$0xff]
    %v28 = vld [vmem:[%s1 + $0x30] sm:$0xff]
    %v29 = vld [vmem:[%s1 + $0x38] sm:$0xff]
    %v30 = vld [vmem:[%s1 + $0x40] sm:$0xff]
    %v31 = vld [vmem:[%s1 + $0x48] sm:$0xff]
    %v32 = vld [vmem:[%s1 + $0x50] sm:$0xff]
    %v33 = vld [vmem:[%s1 + $0x58] sm:$0xff]
    %v34 = vld [vmem:[%s1 + $0x60] sm:$0xff]
    %v35 = vld [vmem:[%s1 + $0x68] sm:$0xff]
    %v36 = vld [vmem:[%s1 + $0x70] sm:$0xff]
    %v37 = vld [vmem:[%s1 + $0x78] sm:$0xff]
    %38 = vmatpush.xpose.msra.mxu0 %v37
    %39 = vmatpush.xpose.msra.mxu0 %v36
    %40 = vmatpush.xpose.msra.mxu0 %v35
    %41 = vmatpush.xpose.msra.mxu0 %v34
    %42 = vmatpush.xpose.msra.mxu0 %v33
    %43 = vmatpush.xpose.msra.mxu0 %v32
    %44 = vmatpush.xpose.msra.mxu0 %v31
    %45 = vmatpush.xpose.msra.mxu0 %v30
    %46 = vmatpush.xpose.msra.mxu0 %v29
    %47 = vmatpush.xpose.msra.mxu0 %v28
    %48 = vmatpush.xpose.msra.mxu0 %v27
    %49 = vmatpush.xpose.msra.mxu0 %v26
    %50 = vmatpush.xpose.msra.mxu0 %v25
    %51 = vmatpush.xpose.msra.mxu0 %v24
    %52 = vmatpush.xpose.msra.mxu0 %v23
    %53 = vmatpush.xpose.msra.mxu0 %v22
    %54 = vmatmul.f32.gmra.mxu0 %v21
    %v55 = vpop.f32.mrf.mxu0
    %v56 = vadd.f32 0.0, %v55
    %57 = vdwg.mxu0
    %v58 = vadd.f32 %v20, %v56
    %59 = vst [vmem:[#allocation2] sm:$0xff] %v58
    // Predicated region
    $region18: #{block_forward.1} parent=1 // pred_check
      %p60 = pneg %p15
    $region19: #{block_forward.1} parent=1 // pred_check_branch
      %62 = sbr.rel (%p60) target = $region21
    $region20: #{block_forward.1} parent=1 // pred_region
      %v63 = vld [vmem:[#allocation2] sm:$0xff]
      %v64 = vld [vmem:[%s2] sm:$0x1]
      %v66 = vperm.slane %v64, 0
      %v68 = vadd.f32 %v63, %v66
      %v69 = vmax.f32 %v68, 0.0
      %70 = vst [vmem:[#allocation3] sm:$0xff] %v69
    $region21: #{block_forward.1} parent=1 // pred_fallthru
      _
    // Predicated region
    $region22: #{block_forward.1} parent=1 // pred_check
      _
    $region23: #{block_forward.1} parent=1 // pred_check_branch
      %72 = sbr.rel (0) target = $region25
    $region24: #{block_forward.1} parent=1 // pred_region
      %74 = vsyncadd [#allocation4], 0
      %s76 = sshll.u32 [#allocation3], 4
      %s77 = int_to_ptr.vmem [resolvable:$true] %s76
      %s78 = sshll.u32 %s3, 4
      %s79 = int_to_ptr.hbm [resolvable:$true] %s78
      %81 = dma.vmem_to_hbm [thread:$0]  %s77, 128, %s79, [#allocation4]
    $region25: #{block_forward.1} parent=1 // pred_fallthru
      _
    // Predicated region
    $region26: #{block_forward.1} parent=1 // pred_check
      _
    $region27: #{block_forward.1} parent=1 // pred_check_branch
      %83 = sbr.rel (0) target = $region29
    $region28: #{block_forward.1} parent=1 // pred_region
      %85 = dma.done [#allocation4], 128
    $region29: #{block_forward.1} parent=1 // pred_fallthru
      _
    %86 = vsyncpa [#allocation4], 1

</llo_original>
